<compile_context>
chip_gen: v6e
topology: v6e:2x2x1
jax: 0.10.0
libtpu: 0.0.40
codegen_flags: <defaults>
</compile_context>

<pallas_src>
import functools

import jax
import jax.numpy as jnp
from jax.experimental import pallas as pl
from jax.experimental.pallas import tpu as pltpu


def _round_up(a: int, b: int) -> int:
    return (a + b - 1) // b * b


def _cdiv(a: int, b: int) -> int:
    return (a + b - 1) // b


# VMEM budgeting (bytes). Conservative so one config runs on v5e/v6e
# (128 MiB physical) and v7x (64 MiB physical per TC).
_VMEM_LIMIT = 48 * 1024 * 1024          # handed to the compiler
_VMEM_BUDGET = 40 * 1024 * 1024         # what the tiles are planned against
_WEIGHT_RESIDENT_MAX = 24 * 1024 * 1024  # double-buffered weight+bias cap


def _linear_kernel(x_ref, w_ref, b_ref, o_ref, acc_ref):
    """One (tm, tn) output tile of y = x @ w + b, accumulated over the K axis.

    x_ref: (tm, tk)  w_ref: (tk, tn)  b_ref: (1, tn)
    o_ref: (tm, tn)  acc_ref: (tm, tn) f32 scratch
    """
    k = pl.program_id(2)

    @pl.when(k == 0)
    def _():
        # Seed the accumulator with the broadcast bias (bias block is constant
        # across k, so this replaces the epilogue add for free).
        acc_ref[...] = jnp.broadcast_to(
            b_ref[...].astype(jnp.float32), acc_ref.shape)

    acc_ref[...] += jnp.dot(
        x_ref[...], w_ref[...], preferred_element_type=jnp.float32)

    @pl.when(k == pl.num_programs(2) - 1)
    def _():
        o_ref[...] = acc_ref[...].astype(o_ref.dtype)


@functools.partial(
    jax.jit,
    static_argnames=("batch_first", "tm", "tn", "tk", "compute_dtype"))
def time_distributed_linear(x, weight, bias, batch_first=False,
                            tm=1024, tn=512, tk=512, compute_dtype=None):
    """Apply a Linear layer to every timestep of `x` via a tiled Pallas kernel.

    x:      (T, B, F_in) if batch_first=False, else (B, T, F_in); or ndim<=2.
    weight: (F_in, F_out)   (transposed vs. torch's (out, in) layout)
    bias:   (F_out,)
    compute_dtype: optional matmul operand dtype (e.g. jnp.bfloat16 on
                   v6e/v7x); accumulation is always f32, output keeps x.dtype.
    """
    orig_ndim = x.ndim
    orig_shape = x.shape
    out_dtype = x.dtype

    if orig_ndim == 1:
        x_flat = x.reshape(1, -1)
    else:
        x_flat = x.reshape(-1, x.shape[-1])

    M, K = x_flat.shape
    Kw, N = weight.shape
    assert K == Kw, (K, Kw)

    # ---- optional bf16 operand cast (f32 accumulate in-kernel) --------------
    w_p = weight
    if compute_dtype is not None and compute_dtype != x_flat.dtype:
        x_flat = x_flat.astype(compute_dtype)
        w_p = weight.astype(compute_dtype)
    in_item = jnp.dtype(x_flat.dtype).itemsize
    out_item = jnp.dtype(out_dtype).itemsize

    b_p = bias.astype(jnp.float32).reshape(1, N)

    # ---- tile selection ------------------------------------------------------
    # Weight-stationary fast path: whole (double-buffered) weight + bias in
    # VMEM => grid only over M, x and y each stream HBM exactly once.
    w_footprint = 2 * K * N * in_item + 2 * N * 4
    weight_stationary = w_footprint <= _WEIGHT_RESIDENT_MAX

    if weight_stationary:
        tn_eff = N
        tk_eff = K
        K_pad = K
        # Per output row: double-buffered x row, double-buffered y row, acc row.
        per_row = 2 * K * in_item + 2 * N * out_item + N * 4
        tm_budget = max(8, (_VMEM_BUDGET - w_footprint) // max(per_row, 1))
        tm_eff = min(tm, tm_budget, _round_up(M, 8))
        tm_eff = max(8, (tm_eff // 8) * 8)
    else:
        tn_eff = min(tn, _round_up(N, 128))        # lane dim: multiple of 128
        tk_eff = K if K <= tk else tk              # keep full K if it fits
        K_pad = _round_up(K, tk_eff)               # reduction axis must be exact
        tm_eff = min(tm, _round_up(M, 8))
        tm_eff = max(8, (tm_eff // 8) * 8)
        # Safety: shrink tm until the double-buffered footprint fits the budget.
        def _footprint(tm_):
            return (2 * tm_ * tk_eff * in_item + 2 * tk_eff * tn_eff * in_item
                    + 2 * tm_ * tn_eff * out_item + tm_ * tn_eff * 4
                    + 2 * tn_eff * 4)
        while tm_eff > 8 and _footprint(tm_eff) > _VMEM_BUDGET:
            tm_eff = max(8, tm_eff // 2)

    gm = _cdiv(M, tm_eff)
    gn = 1 if weight_stationary else _cdiv(N, tn_eff)
    # Megacore (v7x has 2 TCs): make sure a "parallel" axis has >= 2 tiles.
    if gm * gn < 2 and M > 8:
        tm_eff = max(8, _round_up(_cdiv(M, 2), 8))
        gm = _cdiv(M, tm_eff)

    gk = _cdiv(K_pad, tk_eff)
    grid = (gm, gn, gk)

    # ---- zero-pad only K (correctness-critical for the reduction) -----------
    if K_pad != K:
        x_flat = jnp.pad(x_flat, ((0, 0), (0, K_pad - K)))
        w_p = jnp.pad(w_p, ((0, K_pad - K), (0, 0)))

    # ---- cost estimate reflecting actual streaming ---------------------------
    cost = pl.CostEstimate(
        flops=2 * M * K * N,
        transcendentals=0,
        bytes_accessed=(in_item * (M * K_pad * gn + K_pad * N * gm)
                        + out_item * M * N + 4 * N),
    )

    y_flat = pl.pallas_call(
        _linear_kernel,
        out_shape=jax.ShapeDtypeStruct((M, N), out_dtype),
        grid=grid,
        in_specs=[
            pl.BlockSpec((tm_eff, tk_eff), lambda i, j, k: (i, k)),   # x tile
            pl.BlockSpec((tk_eff, tn_eff), lambda i, j, k: (k, j)),   # w slab
            pl.BlockSpec((1, tn_eff), lambda i, j, k: (0, j)),        # bias
        ],
        out_specs=pl.BlockSpec((tm_eff, tn_eff), lambda i, j, k: (i, j)),
        scratch_shapes=[pltpu.VMEM((tm_eff, tn_eff), jnp.float32)],
        compiler_params=pltpu.CompilerParams(
            dimension_semantics=("parallel", "parallel", "arbitrary"),
            vmem_limit_bytes=_VMEM_LIMIT,
        ),
        cost_estimate=cost,
    )(x_flat, w_p, b_p)

    # ---- restore TimeDistributed output structure ----------------------------
    if orig_ndim == 1:
        return y_flat[0]
    if orig_ndim == 2:
        return y_flat
    if batch_first:
        return y_flat.reshape(orig_shape[0], -1, N)
    return y_flat.reshape(-1, orig_shape[1], N)


if __name__ == "__main__":
    # Small shapes: seq=8, batch=2, hidden_in=32, hidden_out=64
    T, B, F_IN, F_OUT = 8, 2, 32, 64

    key = jax.random.PRNGKey(0)
    kx, kw, kb = jax.random.split(key, 3)

    x = jax.random.normal(kx, (T, B, F_IN), dtype=jnp.float32)
    # Deterministic parameter init (synthetic, not a checkpoint load)
    weight = jax.random.normal(kw, (F_IN, F_OUT), dtype=jnp.float32) * 0.05
    bias = jax.random.normal(kb, (F_OUT,), dtype=jnp.float32) * 0.01

    # Reference (same semantics as the torch module)
    y_ref = (x.reshape(-1, F_IN) @ weight + bias).reshape(-1, B, F_OUT)

    # f32 path (exact match with the reference module)
    y = jax.block_until_ready(
        time_distributed_linear(x, weight, bias, batch_first=False))
    assert y.shape == (T, B, F_OUT), y.shape
    assert jnp.allclose(y, y_ref, atol=1e-5, rtol=1e-5)

    # ndim <= 2 path (TimeDistributed forwards straight to the Linear)
    x2d = x[:, 0, :]
    y2d = jax.block_until_ready(time_distributed_linear(x2d, weight, bias))
    assert y2d.shape == (T, F_OUT)
    assert jnp.allclose(y2d, x2d @ weight + bias, atol=1e-5, rtol=1e-5)

    # bf16-operand path (v6e/v7x MXU-native), f32 accumulation
    y_bf16 = jax.block_until_ready(
        time_distributed_linear(x, weight, bias, compute_dtype=jnp.bfloat16))
    assert y_bf16.shape == (T, B, F_OUT)
    assert jnp.allclose(y_bf16, y_ref, atol=5e-2, rtol=5e-2)

    print("KERNEL_OK")
</pallas_src>

<mosaic_0001>
module attributes {stable_mosaic.version = 11 : i64} {
  func.func @_linear_kernel(%arg0: i32, %arg1: i32, %arg2: i32, %arg3: memref<8x32xf32, #tpu.memory_space<vmem>>, %arg4: memref<32x64xf32, #tpu.memory_space<vmem>>, %arg5: memref<1x64xf32, #tpu.memory_space<vmem>>, %arg6: memref<8x64xf32, #tpu.memory_space<vmem>>, %arg7: memref<8x64xf32, #tpu.memory_space<vmem>>) attributes {dimension_semantics = [#tpu.dimension_semantics<parallel>, #tpu.dimension_semantics<parallel>, #tpu.dimension_semantics<arbitrary>], iteration_bounds = array<i64: 2, 1, 1>, scalar_prefetch = 0 : i64, scratch_operands = 1 : i64, tpu.core_type = #tpu.core_type<tc>, window_params = [{transform_indices = @transform_0, window_bounds = array<i64: 8, 32>}, {transform_indices = @transform_1, window_bounds = array<i64: 32, 64>}, {transform_indices = @transform_2, window_bounds = array<i64: 1, 64>}, {transform_indices = @transform_3, window_bounds = array<i64: 8, 64>}]} {
    %c0_i32 = arith.constant 0 : i32
    %0 = arith.cmpi eq, %arg2, %c0_i32 : i32
    %1 = arith.extui %0 : i1 to i32
    %c0_i32_0 = arith.constant 0 : i32
    %2 = arith.cmpi ne, %1, %c0_i32_0 : i32
    scf.if %2 {
      %c0_10 = arith.constant 0 : index
      %c0_11 = arith.constant 0 : index
      %12 = vector.load %arg5[%c0_10, %c0_11] : memref<1x64xf32, #tpu.memory_space<vmem>>, vector<1x64xf32>
      %13 = vector.shape_cast %12 : vector<1x64xf32> to vector<1x64xf32>
      %14 = vector.broadcast %13 : vector<1x64xf32> to vector<8x64xf32>
      %c0_12 = arith.constant 0 : index
      %c0_13 = arith.constant 0 : index
      %15 = vector.load %arg7[%c0_12, %c0_13] : memref<8x64xf32, #tpu.memory_space<vmem>>, vector<8x64xf32>
      tpu.vector_store %arg7[%c0_12, %c0_13], %14 {strides = array<i32>} : memref<8x64xf32, #tpu.memory_space<vmem>>, vector<8x64xf32>,
    } else {
    }
    %c0 = arith.constant 0 : index
    %c0_1 = arith.constant 0 : index
    %3 = vector.load %arg7[%c0, %c0_1] : memref<8x64xf32, #tpu.memory_space<vmem>>, vector<8x64xf32>
    %c0_2 = arith.constant 0 : index
    %c0_3 = arith.constant 0 : index
    %4 = vector.load %arg3[%c0_2, %c0_3] : memref<8x32xf32, #tpu.memory_space<vmem>>, vector<8x32xf32>
    %c0_4 = arith.constant 0 : index
    %c0_5 = arith.constant 0 : index
    %5 = vector.load %arg4[%c0_4, %c0_5] : memref<32x64xf32, #tpu.memory_space<vmem>>, vector<32x64xf32>
    %cst = arith.constant dense<0.000000e+00> : vector<8x64xf32>
    %6 = tpu.matmul %4, %5, %cst {dimension_numbers = #tpu.dot_dimension_numbers<[1], [0], [0], [1], [0, 0, 1, 1], [], []>} : vector<8x32xf32>, vector<32x64xf32>, vector<8x64xf32> -> vector<8x64xf32>
    %7 = arith.addf %3, %6 : vector<8x64xf32>
    %c0_6 = arith.constant 0 : index
    %c0_7 = arith.constant 0 : index
    %8 = vector.load %arg7[%c0_6, %c0_7] : memref<8x64xf32, #tpu.memory_space<vmem>>, vector<8x64xf32>
    tpu.vector_store %arg7[%c0_6, %c0_7], %7 {strides = array<i32>} : memref<8x64xf32, #tpu.memory_space<vmem>>, vector<8x64xf32>,
    %c0_i32_8 = arith.constant 0 : i32
    %9 = arith.cmpi eq, %arg2, %c0_i32_8 : i32
    %10 = arith.extui %9 : i1 to i32
    %c0_i32_9 = arith.constant 0 : i32
    %11 = arith.cmpi ne, %10, %c0_i32_9 : i32
    scf.if %11 {
      %c0_10 = arith.constant 0 : index
      %c0_11 = arith.constant 0 : index
      %12 = vector.load %arg7[%c0_10, %c0_11] : memref<8x64xf32, #tpu.memory_space<vmem>>, vector<8x64xf32>
      %c0_12 = arith.constant 0 : index
      %c0_13 = arith.constant 0 : index
      %13 = vector.load %arg6[%c0_12, %c0_13] : memref<8x64xf32, #tpu.memory_space<vmem>>, vector<8x64xf32>
      tpu.vector_store %arg6[%c0_12, %c0_13], %12 {strides = array<i32>} : memref<8x64xf32, #tpu.memory_space<vmem>>, vector<8x64xf32>,
    } else {
    }
    return
  }
  func.func @transform_0(%arg0: i32, %arg1: i32, %arg2: i32) -> (i32, i32) {
    %c0_i32 = arith.constant 0 : i32
    return %arg0, %arg2 : i32, i32
  }
  func.func @transform_1(%arg0: i32, %arg1: i32, %arg2: i32) -> (i32, i32) {
    %c0_i32 = arith.constant 0 : i32
    return %arg2, %arg1 : i32, i32
  }
  func.func @transform_2(%arg0: i32, %arg1: i32, %arg2: i32) -> (i32, i32) {
    %c0_i32 = arith.constant 0 : i32
    %c0_i32_0 = arith.constant 0 : i32
    return %c0_i32, %arg1 : i32, i32
  }
  func.func @transform_3(%arg0: i32, %arg1: i32, %arg2: i32) -> (i32, i32) {
    %c0_i32 = arith.constant 0 : i32
    return %arg0, %arg1 : i32, i32
  }
}

</mosaic_0001>

<llo_original>
// kernel: time_distributed_linear.1
$region0: #{time_distributed_linear.1}
  #allocation0 [shape = 'u32[]', space=smem, size = 0x4, offset = 0x4, fixed_abs, tag = 'smem constant byte address 0x4 - core index']
  #allocation1 [shape = 'u32[144,128]{1,0:T(1,128)}', space=vmem, size = 0x12000, scoped, tag = 'internal scratch']
  #allocation2 [shape = 'f32[8,64]{1,0:T(8,128)}', space=vmem, size = 0x1000, scoped, tag = 'scratch operand']
  %s0 = inlined_call_operand.hbm [shape: f32[16,32], index: 0, kind: input, shape index: {}]
  %s1 = inlined_call_operand.hbm [shape: f32[32,64], index: 1, kind: input, shape index: {}]
  %s2 = inlined_call_operand.vmem [shape: f32[1,64], index: 2, kind: input, shape index: {}]
  %s3 = inlined_call_operand.hbm [shape: f32[16,64], index: 3, kind: output, shape index: {}]
  %s4 = sld [smem:[#allocation0]]
  $region61: #{time_distributed_linear.1} parent=0
    _
  %s6 = ssub.s32 1, %s4
  %s7 = scalar_select 0, %s6, %s4
  $region1: #{time_distributed_linear.1} parent=0
    #allocation3 [shape = 'u8[8192]{0}', space=vmem, size = 0x2000, scoped, tag = 'input window, operand 0']
    #allocation4 [shape = 's32[2]{0}', space=sflag, size = 0x8, scoped, tag = 'scoped memory for time_distributed_linear.1']
    #allocation5 [shape = 's32[2]{0}', space=sflag, size = 0x8, scoped, tag = 'scoped memory for time_distributed_linear.1']
    #allocation6 [shape = 'u8[16384]{0}', space=vmem, size = 0x4000, scoped, tag = 'input window, operand 1, single buffered']
    #allocation7 [shape = 's32[1]{0}', space=sflag, size = 0x4, scoped, tag = 'scoped memory for time_distributed_linear.1']
    #allocation8 [shape = 'u8[8192]{0}', space=vmem, size = 0x2000, scoped, tag = 'output window, operand 0']
    %8 = vsyncpa [#allocation4], 0
    %s9 = scalar_lea.sflag [#allocation4], 1
    %10 = vsyncpa %s9, 0
    %11 = vsyncpa [#allocation7], 0
    %12 = vsyncpa [#allocation5], 0
    %s13 = scalar_lea.sflag [#allocation5], 1
    %14 = vsyncpa %s13, 0
    loop: start=0, step=1, limit=4
    $region2: #{time_distributed_linear.1} parent=1 // loop_pre_header
      _
    $region3: #{time_distributed_linear.1} parent=1 // loop_header
      %s16 = sphi 0, %s20
      %p17 = scmp.ge.s32.totalorder %s16, 4
      %s23 = sphi 0, %s42
      %s24 = sphi 0, %s38
      %s25 = sphi 0, %s34
      %s26 = sphi 0, %s23
      %s27 = sphi 0, %s24
      %s28 = sphi 0, %s25
      %s29 = sphi 0, %s26
      %s30 = sphi 0, %s27
      %s31 = sphi 0, %s28
      %s47 = sphi 0, %s49
      %s50 = sphi 0, %s47
      %s51 = sphi 0, %s50
      %s67 = sphi 0, %s51
      %s75 = sphi 0, %s77
      %s78 = sphi 0, %s75
      %s79 = sphi 0, %s78
      %s95 = sphi 0, %s79
      %s101 = sphi 0, %s103
      %s104 = sphi 0, %s101
      %s105 = sphi 0, %s104
      %s121 = sphi 0, %s105
      %s129 = sphi 0, %s131
      %s132 = sphi 0, %s129
      %s133 = sphi 0, %s132
      %s149 = sphi 0, %s133
    $region4: #{time_distributed_linear.1} parent=1 // loop_header_branch
      %19 = sbr.rel (%p17) target = $region8
    $region5: #{time_distributed_linear.1} parent=1 // loop_body
      %s21 = ssub.s32 %s16, 1
      %s22 = ssub.s32 %s16, 2
      %s32 = sadd.s32 1, %s25
      %p33 = scmp.ge.s32.totalorder %s32, 1
      %s34 = scalar_select %p33, 0, %s32
      %s35 = sadd.s32 1, %s24
      %s36 = scalar_select %p33, %s35, %s24
      %p37 = scmp.ge.s32.totalorder %s36, 1
      %s38 = scalar_select %p37, 0, %s36
      %s39 = sadd.s32 1, %s23
      %s40 = scalar_select %p37, %s39, %s23
      %p41 = scmp.ge.s32.totalorder %s40, 2
      %s42 = scalar_select %p41, 0, %s40
      %s43 = ssub.s32 %s23, %s42
      %s44 = ssub.s32 %s25, %s34
      %s45 = sor.u32 %s43, %s44
      %p46 = scmp.eq.s32.totalorder %s45, 0
      %s48 = sadd.s32 %s47, 1
      %s49 = scalar_select %p46, %s47, %s48
      %p52 = pneg %p46
      %p53 = scmp.eq.s32.totalorder %s16, 1
      %p54 = por %p52, %p53
      %p55 = scmp.ne.s32.totalorder %s47, %s50
      %p56 = scmp.eq.s32.totalorder %s16, 0
      %p57 = por %p55, %p56
      %p58 = scmp.ne.s32.totalorder %s47, %s50
      %p59 = scmp.eq.s32.totalorder %s21, 1
      %p60 = por %p58, %p59
      %p61 = scmp.ne.s32.totalorder %s50, %s51
      %p62 = scmp.eq.s32.totalorder %s21, 0
      %p63 = por %p61, %p62
      %p64 = scmp.ne.s32.totalorder %s50, %s51
      %p65 = scmp.eq.s32.totalorder %s22, 1
      %p66 = por %p64, %p65
      %p68 = scmp.ne.s32.totalorder %s51, %s67
      %p69 = scmp.eq.s32.totalorder %s22, 0
      %p70 = por %p68, %p69
      %s71 = ssub.s32 %s25, %s34
      %s72 = ssub.s32 %s24, %s38
      %s73 = sor.u32 %s71, %s72
      %p74 = scmp.eq.s32.totalorder %s73, 0
      %s76 = sadd.s32 %s75, 1
      %s77 = scalar_select %p74, %s75, %s76
      %p80 = pneg %p74
      %p81 = scmp.eq.s32.totalorder %s16, 1
      %p82 = por %p80, %p81
      %p83 = scmp.ne.s32.totalorder %s75, %s78
      %p84 = scmp.eq.s32.totalorder %s16, 0
      %p85 = por %p83, %p84
      %p86 = scmp.ne.s32.totalorder %s75, %s78
      %p87 = scmp.eq.s32.totalorder %s21, 1
      %p88 = por %p86, %p87
      %p89 = scmp.ne.s32.totalorder %s78, %s79
      %p90 = scmp.eq.s32.totalorder %s21, 0
      %p91 = por %p89, %p90
      %p92 = scmp.ne.s32.totalorder %s78, %s79
      %p93 = scmp.eq.s32.totalorder %s22, 1
      %p94 = por %p92, %p93
      %p96 = scmp.ne.s32.totalorder %s79, %s95
      %p97 = scmp.eq.s32.totalorder %s22, 0
      %p98 = por %p96, %p97
      %s99 = ssub.s32 %s24, %s38
      %p100 = scmp.eq.s32.totalorder %s99, 0
      %s102 = sadd.s32 %s101, 1
      %s103 = scalar_select %p100, %s101, %s102
      %p106 = pneg %p100
      %p107 = scmp.eq.s32.totalorder %s16, 1
      %p108 = por %p106, %p107
      %p109 = scmp.ne.s32.totalorder %s101, %s104
      %p110 = scmp.eq.s32.totalorder %s16, 0
      %p111 = por %p109, %p110
      %p112 = scmp.ne.s32.totalorder %s101, %s104
      %p113 = scmp.eq.s32.totalorder %s21, 1
      %p114 = por %p112, %p113
      %p115 = scmp.ne.s32.totalorder %s104, %s105
      %p116 = scmp.eq.s32.totalorder %s21, 0
      %p117 = por %p115, %p116
      %p118 = scmp.ne.s32.totalorder %s104, %s105
      %p119 = scmp.eq.s32.totalorder %s22, 1
      %p120 = por %p118, %p119
      %p122 = scmp.ne.s32.totalorder %s105, %s121
      %p123 = scmp.eq.s32.totalorder %s22, 0
      %p124 = por %p122, %p123
      %s125 = ssub.s32 %s23, %s42
      %s126 = ssub.s32 %s24, %s38
      %s127 = sor.u32 %s125, %s126
      %p128 = scmp.eq.s32.totalorder %s127, 0
      %s130 = sadd.s32 %s129, 1
      %s131 = scalar_select %p128, %s129, %s130
      %p134 = pneg %p128
      %p135 = scmp.eq.s32.totalorder %s16, 1
      %p136 = por %p134, %p135
      %p137 = scmp.ne.s32.totalorder %s129, %s132
      %p138 = scmp.eq.s32.totalorder %s16, 0
      %p139 = por %p137, %p138
      %p140 = scmp.ne.s32.totalorder %s129, %s132
      %p141 = scmp.eq.s32.totalorder %s21, 1
      %p142 = por %p140, %p141
      %p143 = scmp.ne.s32.totalorder %s132, %s133
      %p144 = scmp.eq.s32.totalorder %s21, 0
      %p145 = por %p143, %p144
      %p146 = scmp.ne.s32.totalorder %s132, %s133
      %p147 = scmp.eq.s32.totalorder %s22, 1
      %p148 = por %p146, %p147
      %p150 = scmp.ne.s32.totalorder %s133, %s149
      %p151 = scmp.eq.s32.totalorder %s22, 0
      %p152 = por %p150, %p151
      %p153 = scmp.le.s32.totalorder 1, %s16
      %p154 = scmp.lt.s32.totalorder %s16, 3
      %p155 = pnand %p153, %p154
      %p156 = pneg %p155
      // Predicated region
      $region9: #{time_distributed_linear.1} parent=5 // pred_check
        _
      $region10: #{time_distributed_linear.1} parent=5 // pred_check_branch
        %158 = sbr.rel (%p155) target = $region12
      $region11: #{time_distributed_linear.1} parent=5 // pred_region
        %s159 = ssub.s32 %s16, 1
        // Predicated region
        $region13: #{time_distributed_linear.1} parent=11 // pred_check
          %p160 = pneg %p91
        $region14: #{time_distributed_linear.1} parent=11 // pred_check_branch
          %162 = sbr.rel (%p160) target = $region16
        $region15: #{time_distributed_linear.1} parent=11 // pred_region
          %s163 = smul.u32 4, %s28
          %s165 = ssub.s32 512, 512
          %166 = vsyncadd [#allocation7], %s165
          %s167 = sadd.s32 %s27, %s163
          %s168 = smul.addr %s167, 128
          %s169 = scalar_lea.hbm %s1, %s168
          %s170 = sshll.u32 [#allocation6], 4
          %s171 = int_to_ptr.vmem [resolvable:$true] %s170
          %176 = dma.hbm_to_vmem [thread:$0]  %s169, 512, %s171, [#allocation7], 128, 128, 8
        $region16: #{time_distributed_linear.1} parent=11 // pred_fallthru
          _
        // Predicated region
        $region17: #{time_distributed_linear.1} parent=11 // pred_check
          %p177 = pneg %p117
        $region18: #{time_distributed_linear.1} parent=11 // pred_check_branch
          %179 = sbr.rel (%p177) target = $region20
        $region19: #{time_distributed_linear.1} parent=11 // pred_region
          %p180 = scmp.lt.s32.totalorder %s27, 0
          %s181 = scalar_select %p180, %s27, 0
          %s182 = scalar_lea.vmem %s2, %s181
        $region20: #{time_distributed_linear.1} parent=11 // pred_fallthru
          _
      $region12: #{time_distributed_linear.1} parent=5 // pred_fallthru
        _
      %p183 = scmp.lt.s32.totalorder %s16, 2
      // Predicated region
      $region21: #{time_distributed_linear.1} parent=5 // pred_check
        %p184 = pneg %p183
      $region22: #{time_distributed_linear.1} parent=5 // pred_check_branch
        %186 = sbr.rel (%p184) target = $region24
      $region23: #{time_distributed_linear.1} parent=5 // pred_region
        // Predicated region
        $region25: #{time_distributed_linear.1} parent=23 // pred_check
          %p187 = pneg %p57
        $region26: #{time_distributed_linear.1} parent=23 // pred_check_branch
          %189 = sbr.rel (%p187) target = $region28
        $region27: #{time_distributed_linear.1} parent=23 // pred_region
          %s190 = sand.u32 %s47, 1
          %s191 = scalar_lea.sflag [#allocation4], %s190
          %s192 = sand.u32 %s47, 1
          %s193 = smul.addr %s192, 8
          %s194 = scalar_lea.vmem [#allocation3], %s193
          %s196 = ssub.s32 128, 128
          %197 = vsyncadd %s191, %s196
          %s198 = sadd.s32 %s25, %s23
          %s199 = smul.addr %s198, 128
          %s200 = scalar_lea.hbm %s0, %s199
          %s202 = sshll.u32 %s194, 4
          %s203 = int_to_ptr.vmem [resolvable:$true] %s202
          %205 = dma.hbm_to_vmem [thread:$0]  %s200, 128, %s203, %s191
        $region28: #{time_distributed_linear.1} parent=23 // pred_fallthru
          _
      $region24: #{time_distributed_linear.1} parent=5 // pred_fallthru
        _
      %p206 = scmp.le.s32.totalorder 1, %s16
      %p207 = scmp.lt.s32.totalorder %s16, 3
      %p208 = pnand %p206, %p207
      %p209 = pneg %p208
      // Predicated region
      $region29: #{time_distributed_linear.1} parent=5 // pred_check
        _
      $region30: #{time_distributed_linear.1} parent=5 // pred_check_branch
        %211 = sbr.rel (%p208) target = $region32
      $region31: #{time_distributed_linear.1} parent=5 // pred_region
        %s212 = ssub.s32 %s16, 1
        %s213 = sand.u32 %s50, 1
        %s214 = scalar_lea.sflag [#allocation4], %s213
        %s215 = sand.u32 %s50, 1
        %s216 = smul.addr %s215, 8
        %s217 = scalar_lea.vmem [#allocation3], %s216
        // Predicated region
        $region33: #{time_distributed_linear.1} parent=31 // pred_check
          %p218 = pneg %p63
        $region34: #{time_distributed_linear.1} parent=31 // pred_check_branch
          %220 = sbr.rel (%p218) target = $region36
        $region35: #{time_distributed_linear.1} parent=31 // pred_region
          %221 = dma.done %s214, 128
        $region36: #{time_distributed_linear.1} parent=31 // pred_fallthru
          _
        // Predicated region
        $region37: #{time_distributed_linear.1} parent=31 // pred_check
          %p222 = pneg %p91
        $region38: #{time_distributed_linear.1} parent=31 // pred_check_branch
          %224 = sbr.rel (%p222) target = $region40
        $region39: #{time_distributed_linear.1} parent=31 // pred_region
          %225 = dma.done [#allocation7], 512
        $region40: #{time_distributed_linear.1} parent=31 // pred_fallthru
          _
        %s226 = sand.u32 %s50, 1
        %s227 = scalar_lea.sflag [#allocation4], %s226
        %s228 = sand.u32 %s50, 1
        %s229 = smul.addr %s228, 8
        %s230 = scalar_lea.vmem [#allocation3], %s229
        %p231 = pneg %p63
        %p232 = pneg %p60
        %p233 = pneg %p91
        %p234 = pneg %p88
        %p235 = scmp.lt.s32.totalorder %s27, 0
        %s236 = scalar_select %p235, %s27, 0
        %s237 = scalar_lea.vmem %s2, %s236
        %p238 = pneg %p117
        %p239 = pneg %p114
        %p240 = pneg %p145
        %p241 = pneg %p142
        %s242 = sand.u32 %s132, 1
        %s243 = scalar_lea.sflag [#allocation5], %s242
        %s244 = sand.u32 %s132, 1
        %s245 = smul.addr %s244, 8
        %s246 = scalar_lea.vmem [#allocation8], %s245
        %s247 = smul.u32 4, %s28
        %p248 = scmp.lt.s32.totalorder %s27, 0
        %s249 = scalar_select %p248, %s27, 0
        %s250 = scalar_lea.vmem %s2, %s249
        %p251 = scmp.eq.s32.totalorder %s28, 0
        // Predicated region
        $region41: #{time_distributed_linear.1} parent=31 // pred_check
          %p252 = pneg %p251
        $region42: #{time_distributed_linear.1} parent=31 // pred_check_branch
          %254 = sbr.rel (%p252) target = $region44
        $region43: #{time_distributed_linear.1} parent=31 // pred_region
          %v255 = vld [vmem:[%s250] sm:$0x1]
          %v257 = vlaneseq
          %v258 = vshrl.u32 %v257, 7
          %v259 = vsub.s32 0, %v258
          %v260 = vrot.slane %v255, %v259
          %vm262 = vcmask 523264
          %263 = vst.msk [vmem:[#allocation2] sm:$0xff] %vm262, %v260
        $region44: #{time_distributed_linear.1} parent=31 // pred_fallthru
          _
        %v264 = vld [vmem:[#allocation2] sm:$0xff]
        %v265 = vld [vmem:[%s217] sm:$0xff]
        %v266 = vld [vmem:[#allocation6] sm:$0xff]
        %v267 = vld [vmem:[#allocation6 + $0x8] sm:$0xff]
        %v268 = vld [vmem:[#allocation6 + $0x10] sm:$0xff]
        %v269 = vld [vmem:[#allocation6 + $0x18] sm:$0xff]
        %vm270 = vcmask 261120
        %v272 = vsel %vm270, %v265, 0
        %274 = vmatprep.subr.mxu0 0.0
        %275 = vmatpush1.msra.mxu0 0.0
        %276 = vmatprep.subr.mxu0 0.0
        %277 = vmatpush1.msra.mxu0 0.0
        %278 = vmatprep.subr.mxu0 0.0
        %279 = vmatpush1.msra.mxu0 0.0
        %280 = vmatprep.subr.mxu0 0.0
        %281 = vmatpush1.msra.mxu0 0.0
        %282 = vmatprep.subr.mxu0 0.0
        %283 = vmatpush1.msra.mxu0 0.0
        %284 = vmatprep.subr.mxu0 0.0
        %285 = vmatpush1.msra.mxu0 0.0
        %286 = vmatprep.subr.mxu0 0.0
        %287 = vmatpush1.msra.mxu0 0.0
        %288 = vmatprep.subr.mxu0 0.0
        %289 = vmatpush1.msra.mxu0 0.0
        %290 = vmatprep.subr.mxu0 0.0
        %291 = vmatpush1.msra.mxu0 0.0
        %292 = vmatprep.subr.mxu0 0.0
        %293 = vmatpush1.msra.mxu0 0.0
        %294 = vmatprep.subr.mxu0 0.0
        %295 = vmatpush1.msra.mxu0 0.0
        %296 = vmatprep.subr.mxu0 0.0
        %297 = vmatpush1.msra.mxu0 0.0
        %298 = vmatprep.subr.mxu0 0.0
        %299 = vmatpush1.msra.mxu0 %v269
        %300 = vmatprep.subr.mxu0 0.0
        %301 = vmatpush1.msra.mxu0 %v268
        %302 = vmatprep.subr.mxu0 0.0
        %303 = vmatpush1.msra.mxu0 %v267
        %304 = vmatprep.subr.mxu0 0.0
        %305 = vmatpush1.msra.mxu0 %v266
        %306 = vmatprep.subr.mxu0 0.0
        %307 = vmatpush2.msra.mxu0 0.0
        %308 = vmatprep.subr.mxu0 0.0
        %309 = vmatpush2.msra.mxu0 0.0
        %310 = vmatprep.subr.mxu0 0.0
        %311 = vmatpush2.msra.mxu0 0.0
        %312 = vmatprep.subr.mxu0 0.0
        %313 = vmatpush2.msra.mxu0 0.0
        %314 = vmatprep.subr.mxu0 0.0
        %315 = vmatpush2.msra.mxu0 0.0
        %316 = vmatprep.subr.mxu0 0.0
        %317 = vmatpush2.msra.mxu0 0.0
        %318 = vmatprep.subr.mxu0 0.0
        %319 = vmatpush2.msra.mxu0 0.0
        %320 = vmatprep.subr.mxu0 0.0
        %321 = vmatpush2.msra.mxu0 0.0
        %322 = vmatprep.subr.mxu0 0.0
        %323 = vmatpush2.msra.mxu0 0.0
        %324 = vmatprep.subr.mxu0 0.0
        %325 = vmatpush2.msra.mxu0 0.0
        %326 = vmatprep.subr.mxu0 0.0
        %327 = vmatpush2.msra.mxu0 0.0
        %328 = vmatprep.subr.mxu0 0.0
        %329 = vmatpush2.msra.mxu0 0.0
        %330 = vmatprep.subr.mxu0 0.0
        %331 = vmatpush2.msra.mxu0 0.0
        %332 = vmatprep.subr.mxu0 0.0
        %333 = vmatpush2.msra.mxu0 0.0
        %334 = vmatprep.subr.mxu0 0.0
        %335 = vmatpush2.msra.mxu0 0.0
        %336 = vmatprep.subr.mxu0 0.0
        %337 = vmatpush2.msra.mxu0 0.0
        %338 = vmatprep.mubr.f32.mxu0 0.0
        %339 = vmatmul.mubr.f32.gmra.mxu0 %v272
        %v340 = vpop.f32.mrf.mxu0
        %v341 = vadd.f32 0.0, %v340
        %v342 = vpop.f32.mrf.mxu0
        %343 = vdwg.mxu0
        %v344 = vadd.f32 %v264, %v341
        %vm345 = vcmask 523264
        %346 = vst.msk [vmem:[#allocation2] sm:$0xff] %vm345, %v344
        // Predicated region
        $region45: #{time_distributed_linear.1} parent=31 // pred_check
          %p347 = pneg %p251
        $region46: #{time_distributed_linear.1} parent=31 // pred_check_branch
          %349 = sbr.rel (%p347) target = $region48
        $region47: #{time_distributed_linear.1} parent=31 // pred_region
          %v350 = vld [vmem:[#allocation2] sm:$0xff]
          %351 = vst.msk [vmem:[%s246] sm:$0xff] %vm345, %v350
        $region48: #{time_distributed_linear.1} parent=31 // pred_fallthru
          _
        %s352 = sand.u32 %s132, 1
        %s353 = scalar_lea.sflag [#allocation5], %s352
        %s354 = sand.u32 %s132, 1
        %s355 = smul.addr %s354, 8
        %s356 = scalar_lea.vmem [#allocation8], %s355
        // Predicated region
        $region49: #{time_distributed_linear.1} parent=31 // pred_check
          %p357 = pneg %p142
        $region50: #{time_distributed_linear.1} parent=31 // pred_check_branch
          %359 = sbr.rel (%p357) target = $region52
        $region51: #{time_distributed_linear.1} parent=31 // pred_region
          %s361 = ssub.s32 128, 128
          %362 = vsyncadd %s353, %s361
          %s363 = sadd.s32 %s27, %s26
          %s364 = smul.addr %s363, 128
          %s365 = scalar_lea.hbm %s3, %s364
          %s367 = sshll.u32 %s356, 4
          %s368 = int_to_ptr.vmem [resolvable:$true] %s367
          %370 = dma.vmem_to_hbm [thread:$0]  %s368, 128, %s365, %s353
        $region52: #{time_distributed_linear.1} parent=31 // pred_fallthru
          _
      $region32: #{time_distributed_linear.1} parent=5 // pred_fallthru
        _
      %p371 = scmp.le.s32.totalorder 2, %s16
      // Predicated region
      $region53: #{time_distributed_linear.1} parent=5 // pred_check
        %p372 = pneg %p371
      $region54: #{time_distributed_linear.1} parent=5 // pred_check_branch
        %374 = sbr.rel (%p372) target = $region56
      $region55: #{time_distributed_linear.1} parent=5 // pred_region
        %s375 = ssub.s32 %s16, 2
        // Predicated region
        $region57: #{time_distributed_linear.1} parent=55 // pred_check
          %p376 = pneg %p148
        $region58: #{time_distributed_linear.1} parent=55 // pred_check_branch
          %378 = sbr.rel (%p376) target = $region60
        $region59: #{time_distributed_linear.1} parent=55 // pred_region
          %s379 = sand.u32 %s133, 1
          %s380 = scalar_lea.sflag [#allocation5], %s379
          %s381 = sand.u32 %s133, 1
          %s382 = smul.addr %s381, 8
          %s383 = scalar_lea.vmem [#allocation8], %s382
          %384 = dma.done %s380, 128
        $region60: #{time_distributed_linear.1} parent=55 // pred_fallthru
          _
      $region56: #{time_distributed_linear.1} parent=5 // pred_fallthru
        _
    $region6: #{time_distributed_linear.1} parent=1 // loop_footer
      %s20 = sadd.s32 1, %s16
    $region7: #{time_distributed_linear.1} parent=1 // loop_footer_branch
      %15 = sbr.rel target = $region3
    $region8: #{time_distributed_linear.1} parent=1 // loop_exit
      _
    %385 = vsyncpa [#allocation4], 1
    %s386 = scalar_lea.sflag [#allocation4], 1
    %387 = vsyncpa %s386, 1
    %388 = vsyncpa [#allocation7], 1
    %389 = vsyncpa [#allocation5], 1
    %s390 = scalar_lea.sflag [#allocation5], 1
    %391 = vsyncpa %s390, 1

</llo_original>
